<compile_context>
chip_gen: v6e
topology: v6e:2x2x1
jax: 0.10.0
libtpu: 0.0.40
codegen_flags: <defaults>
</compile_context>

<pallas_src>
import jax
import jax.numpy as jnp
from jax.experimental import pallas as pl
from jax.experimental.pallas import tpu as pltpu


def _round_up(x, m):
    return ((x + m - 1) // m) * m


def actor_kernel(x_ref, w0_ref, b0_ref, w1_ref, b1_ref, w2_ref, b2_ref, o_ref):
    # Hidden layer 0: x @ W0 + b0, ReLU (MXU in weight dtype, f32 accumulation,
    # f32 elementwise).
    h = jnp.dot(x_ref[...].astype(w0_ref.dtype), w0_ref[...],
                preferred_element_type=jnp.float32)
    h = jnp.maximum(h + b0_ref[...], 0.0)
    # Hidden layer 1: h @ W1 + b1, ReLU
    h = jnp.dot(h.astype(w1_ref.dtype), w1_ref[...],
                preferred_element_type=jnp.float32)
    h = jnp.maximum(h + b1_ref[...], 0.0)
    # Output layer: h @ W2 + b2, tanh.  W2/b2 are lane-padded to 128 columns
    # for a clean MXU shape, but only the first A columns are stored so the
    # HBM writeback stream is A*4 bytes/row instead of 512 bytes/row.
    o = jnp.dot(h.astype(w2_ref.dtype), w2_ref[...],
                preferred_element_type=jnp.float32)
    o = jnp.tanh(o + b2_ref[...])
    a = o_ref.shape[-1]
    o_ref[...] = o[:, :a].astype(o_ref.dtype)


def prepare_actor_params(params, *, use_bf16=True):
    """One-time parameter preparation (call once, NOT per forward step).

    - Pads the output layer's action dim to a multiple of 128 (clean MXU
      shape; padded columns are exact zeros and are never stored).
    - Casts weights to the MXU dtype (bf16 by default, f32 accumulation is
      kept in the kernel).  Biases stay f32 (bias/ReLU/tanh run in f32).
    """
    w0, b0 = params["w0"], params["b0"]
    w1, b1 = params["w1"], params["b1"]
    w2, b2 = params["w2"], params["b2"]
    a = w2.shape[1]
    a_pad = _round_up(max(a, 1), 128)
    if a_pad != a:
        w2 = jnp.pad(w2, ((0, 0), (0, a_pad - a)))
        b2 = jnp.pad(b2, ((0, 0), (0, a_pad - a)))
    mxu_dtype = jnp.bfloat16 if use_bf16 else jnp.float32
    return {
        "w0": w0.astype(mxu_dtype), "b0": b0.astype(jnp.float32),
        "w1": w1.astype(mxu_dtype), "b1": b1.astype(jnp.float32),
        "w2": w2.astype(mxu_dtype), "b2": b2.astype(jnp.float32),
    }


def actor_forward(x, prepared, action_dim, *, block_b=1024):
    """Actor MLP forward with a Pallas TPU kernel.

    x:         (B, state_dim) array (f32, or bf16 if the caller already has it).
    prepared:  output of prepare_actor_params (weights (in,out), w2/b2 padded).
    action_dim: true (unpadded) action dimension A.
    block_b:   target batch tile size (rounded to a multiple of 8).
    """
    w0, b0 = prepared["w0"], prepared["b0"]
    w1, b1 = prepared["w1"], prepared["b1"]
    w2, b2 = prepared["w2"], prepared["b2"]

    B, S = x.shape
    H0 = w0.shape[1]
    H1 = w1.shape[1]
    A_pad = w2.shape[1]
    A = int(action_dim)
    assert A <= A_pad

    # ---- grid sizing: minimal padding, enough steps for megacore + pipeline --
    block_b = _round_up(max(block_b, 8), 8)
    n_steps = pl.cdiv(B, block_b)
    if B >= 4096:
        n_steps = max(n_steps, 4)   # keep the input/output DMA pipelined
    elif B >= 1024:
        n_steps = max(n_steps, 2)   # v7x: give both TensorCores work
    bb = _round_up(pl.cdiv(B, n_steps), 8)
    n_steps = pl.cdiv(B, bb)
    B_pad = n_steps * bb            # pads at most a handful of rows
    if B_pad != B:
        x = jnp.pad(x, ((0, B_pad - B), (0, 0)))

    # Tile only the batch dimension; weights/biases use constant index_maps so
    # they are DMA'd once and stay VMEM-resident across all grid steps.
    in_specs = [
        pl.BlockSpec((bb, S), lambda i: (i, 0)),       # x
        pl.BlockSpec((S, H0), lambda i: (0, 0)),       # w0
        pl.BlockSpec((1, H0), lambda i: (0, 0)),       # b0
        pl.BlockSpec((H0, H1), lambda i: (0, 0)),      # w1
        pl.BlockSpec((1, H1), lambda i: (0, 0)),       # b1
        pl.BlockSpec((H1, A_pad), lambda i: (0, 0)),   # w2 (lane-padded)
        pl.BlockSpec((1, A_pad), lambda i: (0, 0)),    # b2 (lane-padded)
    ]
    # Narrow output: last block dim equals the full array dim (A), so this is
    # legal even though A < 128; the HBM array is row-contiguous.
    out_specs = pl.BlockSpec((bb, A), lambda i: (i, 0))

    out = pl.pallas_call(
        actor_kernel,
        out_shape=jax.ShapeDtypeStruct((B_pad, A), jnp.float32),
        grid_spec=pltpu.PrefetchScalarGridSpec(
            num_scalar_prefetch=0,
            grid=(n_steps,),
            in_specs=in_specs,
            out_specs=out_specs,
        ),
        compiler_params=pltpu.CompilerParams(
            dimension_semantics=("parallel",),
        ),
    )(x, w0, b0, w1, b1, w2, b2)

    # Only strip batch padding when any was added (no column slice needed).
    return out if B_pad == B else out[:B]


def init_actor_params(key, state_dim, action_dim, hidden_dims=(256, 256),
                      init_weight=0.003):
    """Deterministic init mirroring PyTorch:
    - hidden Linear layers: U(-1/sqrt(fan_in), 1/sqrt(fan_in)) for W and b
    - output layer: U(-init_weight, init_weight) for W and b (init_layer_uniform_)
    Weights stored as (in_dim, out_dim).
    """
    params = {}
    dims = [state_dim] + list(hidden_dims)
    keys = jax.random.split(key, 2 * (len(hidden_dims) + 1))
    k_idx = 0
    for i in range(len(hidden_dims)):
        fan_in = dims[i]
        bound = 1.0 / (fan_in ** 0.5)
        params[f"w{i}"] = jax.random.uniform(
            keys[k_idx], (dims[i], dims[i + 1]), jnp.float32, -bound, bound)
        k_idx += 1
        params[f"b{i}"] = jax.random.uniform(
            keys[k_idx], (1, dims[i + 1]), jnp.float32, -bound, bound)
        k_idx += 1
    i = len(hidden_dims)
    params[f"w{i}"] = jax.random.uniform(
        keys[k_idx], (dims[-1], action_dim), jnp.float32,
        -init_weight, init_weight)
    k_idx += 1
    params[f"b{i}"] = jax.random.uniform(
        keys[k_idx], (1, action_dim), jnp.float32, -init_weight, init_weight)
    return params


def actor_forward_ref(x, params):
    """Pure-JAX reference for correctness check."""
    h = jnp.maximum(x @ params["w0"] + params["b0"], 0.0)
    h = jnp.maximum(h @ params["w1"] + params["b1"], 0.0)
    return jnp.tanh(h @ params["w2"] + params["b2"])


if __name__ == "__main__":
    key = jax.random.PRNGKey(0)
    k_param, k_x, k_x2 = jax.random.split(key, 3)

    batch = 8
    state_dim = 16
    action_dim = 4
    hidden_dims = (256, 256)   # matches the PyTorch module's default

    params = init_actor_params(k_param, state_dim, action_dim, hidden_dims)
    x = jax.random.normal(k_x, (batch, state_dim), jnp.float32)
    ref = jax.block_until_ready(actor_forward_ref(x, params))

    # f32 MXU path: exact-ish vs reference.
    prep_f32 = prepare_actor_params(params, use_bf16=False)
    out = jax.block_until_ready(actor_forward(x, prep_f32, action_dim))
    assert out.shape == (batch, action_dim)
    assert jnp.allclose(out, ref, atol=1e-5, rtol=1e-5), "mismatch vs reference (f32)"

    # bf16 MXU path (default perf mode on v6e/v7x): loose tolerance check.
    prep_bf16 = prepare_actor_params(params, use_bf16=True)
    out_bf16 = jax.block_until_ready(actor_forward(x, prep_bf16, action_dim))
    assert out_bf16.shape == (batch, action_dim)
    assert jnp.allclose(out_bf16, ref, atol=5e-2, rtol=5e-2), "mismatch vs reference (bf16)"

    # Multi-step grid + batch-padding path (exercises grid>1 and row padding).
    batch2 = 1030
    x2 = jax.random.normal(k_x2, (batch2, state_dim), jnp.float32)
    ref2 = jax.block_until_ready(actor_forward_ref(x2, params))
    out2 = jax.block_until_ready(
        actor_forward(x2, prep_bf16, action_dim, block_b=512))
    assert out2.shape == (batch2, action_dim)
    assert jnp.allclose(out2, ref2, atol=5e-2, rtol=5e-2), "mismatch vs reference (padded/bf16)"

    print("KERNEL_OK")
</pallas_src>

<mosaic_0001>
module attributes {stable_mosaic.version = 11 : i64} {
  func.func @actor_kernel(%arg0: i32, %arg1: memref<8x16xf32, #tpu.memory_space<vmem>>, %arg2: memref<16x256xf32, #tpu.memory_space<vmem>>, %arg3: memref<1x256xf32, #tpu.memory_space<vmem>>, %arg4: memref<256x256xf32, #tpu.memory_space<vmem>>, %arg5: memref<1x256xf32, #tpu.memory_space<vmem>>, %arg6: memref<256x128xf32, #tpu.memory_space<vmem>>, %arg7: memref<1x128xf32, #tpu.memory_space<vmem>>, %arg8: memref<8x4xf32, #tpu.memory_space<vmem>>) attributes {dimension_semantics = [#tpu.dimension_semantics<parallel>], iteration_bounds = array<i64: 1>, scalar_prefetch = 0 : i64, scratch_operands = 0 : i64, tpu.core_type = #tpu.core_type<tc>, window_params = [{transform_indices = @transform_0, window_bounds = array<i64: 8, 16>}, {pipeline_mode = #tpu.pipeline_mode<synchronous>, transform_indices = @transform_1, window_bounds = array<i64: 16, 256>}, {pipeline_mode = #tpu.pipeline_mode<synchronous>, transform_indices = @transform_2, window_bounds = array<i64: 1, 256>}, {pipeline_mode = #tpu.pipeline_mode<synchronous>, transform_indices = @transform_3, window_bounds = array<i64: 256, 256>}, {pipeline_mode = #tpu.pipeline_mode<synchronous>, transform_indices = @transform_4, window_bounds = array<i64: 1, 256>}, {pipeline_mode = #tpu.pipeline_mode<synchronous>, transform_indices = @transform_5, window_bounds = array<i64: 256, 128>}, {pipeline_mode = #tpu.pipeline_mode<synchronous>, transform_indices = @transform_6, window_bounds = array<i64: 1, 128>}, {transform_indices = @transform_7, window_bounds = array<i64: 8, 4>}]} {
    %c0 = arith.constant 0 : index
    %c0_0 = arith.constant 0 : index
    %0 = vector.load %arg1[%c0, %c0_0] : memref<8x16xf32, #tpu.memory_space<vmem>>, vector<8x16xf32>
    %c0_1 = arith.constant 0 : index
    %c0_2 = arith.constant 0 : index
    %1 = vector.load %arg2[%c0_1, %c0_2] : memref<16x256xf32, #tpu.memory_space<vmem>>, vector<16x256xf32>
    %cst = arith.constant dense<0.000000e+00> : vector<8x256xf32>
    %2 = tpu.matmul %0, %1, %cst {dimension_numbers = #tpu.dot_dimension_numbers<[1], [0], [0], [1], [0, 0, 1, 1], [], []>} : vector<8x16xf32>, vector<16x256xf32>, vector<8x256xf32> -> vector<8x256xf32>
    %c0_3 = arith.constant 0 : index
    %c0_4 = arith.constant 0 : index
    %3 = vector.load %arg3[%c0_3, %c0_4] : memref<1x256xf32, #tpu.memory_space<vmem>>, vector<1x256xf32>
    %4 = vector.broadcast %3 : vector<1x256xf32> to vector<8x256xf32>
    %5 = arith.addf %2, %4 : vector<8x256xf32>
    %cst_5 = arith.constant 0.000000e+00 : f32
    %6 = vector.broadcast %cst_5 : f32 to vector<8x256xf32>
    %7 = arith.maximumf %5, %6 : vector<8x256xf32>
    %c0_6 = arith.constant 0 : index
    %c0_7 = arith.constant 0 : index
    %8 = vector.load %arg4[%c0_6, %c0_7] : memref<256x256xf32, #tpu.memory_space<vmem>>, vector<256x256xf32>
    %cst_8 = arith.constant dense<0.000000e+00> : vector<8x256xf32>
    %9 = tpu.matmul %7, %8, %cst_8 {dimension_numbers = #tpu.dot_dimension_numbers<[1], [0], [0], [1], [0, 0, 1, 1], [], []>} : vector<8x256xf32>, vector<256x256xf32>, vector<8x256xf32> -> vector<8x256xf32>
    %c0_9 = arith.constant 0 : index
    %c0_10 = arith.constant 0 : index
    %10 = vector.load %arg5[%c0_9, %c0_10] : memref<1x256xf32, #tpu.memory_space<vmem>>, vector<1x256xf32>
    %11 = vector.broadcast %10 : vector<1x256xf32> to vector<8x256xf32>
    %12 = arith.addf %9, %11 : vector<8x256xf32>
    %cst_11 = arith.constant 0.000000e+00 : f32
    %13 = vector.broadcast %cst_11 : f32 to vector<8x256xf32>
    %14 = arith.maximumf %12, %13 : vector<8x256xf32>
    %c0_12 = arith.constant 0 : index
    %c0_13 = arith.constant 0 : index
    %15 = vector.load %arg6[%c0_12, %c0_13] : memref<256x128xf32, #tpu.memory_space<vmem>>, vector<256x128xf32>
    %cst_14 = arith.constant dense<0.000000e+00> : vector<8x128xf32>
    %16 = tpu.matmul %14, %15, %cst_14 {dimension_numbers = #tpu.dot_dimension_numbers<[1], [0], [0], [1], [0, 0, 1, 1], [], []>} : vector<8x256xf32>, vector<256x128xf32>, vector<8x128xf32> -> vector<8x128xf32>
    %c0_15 = arith.constant 0 : index
    %c0_16 = arith.constant 0 : index
    %17 = vector.load %arg7[%c0_15, %c0_16] : memref<1x128xf32, #tpu.memory_space<vmem>>, vector<1x128xf32>
    %18 = vector.broadcast %17 : vector<1x128xf32> to vector<8x128xf32>
    %19 = arith.addf %16, %18 : vector<8x128xf32>
    %20 = math.tanh %19 : vector<8x128xf32>
    %21 = vector.extract_strided_slice %20 {offsets = [0, 0], sizes = [8, 4], strides = [1, 1]} : vector<8x128xf32> to vector<8x4xf32>
    %c0_17 = arith.constant 0 : index
    %c0_18 = arith.constant 0 : index
    %22 = vector.load %arg8[%c0_17, %c0_18] : memref<8x4xf32, #tpu.memory_space<vmem>>, vector<8x4xf32>
    tpu.vector_store %arg8[%c0_17, %c0_18], %21 {strides = array<i32>} : memref<8x4xf32, #tpu.memory_space<vmem>>, vector<8x4xf32>,
    return
  }
  func.func @transform_0(%arg0: i32) -> (i32, i32) {
    %c0_i32 = arith.constant 0 : i32
    %c0_i32_0 = arith.constant 0 : i32
    return %arg0, %c0_i32 : i32, i32
  }
  func.func @transform_1(%arg0: i32) -> (i32, i32) {
    %c0_i32 = arith.constant 0 : i32
    %c0_i32_0 = arith.constant 0 : i32
    %c0_i32_1 = arith.constant 0 : i32
    return %c0_i32, %c0_i32_0 : i32, i32
  }
  func.func @transform_2(%arg0: i32) -> (i32, i32) {
    %c0_i32 = arith.constant 0 : i32
    %c0_i32_0 = arith.constant 0 : i32
    %c0_i32_1 = arith.constant 0 : i32
    return %c0_i32, %c0_i32_0 : i32, i32
  }
  func.func @transform_3(%arg0: i32) -> (i32, i32) {
    %c0_i32 = arith.constant 0 : i32
    %c0_i32_0 = arith.constant 0 : i32
    %c0_i32_1 = arith.constant 0 : i32
    return %c0_i32, %c0_i32_0 : i32, i32
  }
  func.func @transform_4(%arg0: i32) -> (i32, i32) {
    %c0_i32 = arith.constant 0 : i32
    %c0_i32_0 = arith.constant 0 : i32
    %c0_i32_1 = arith.constant 0 : i32
    return %c0_i32, %c0_i32_0 : i32, i32
  }
  func.func @transform_5(%arg0: i32) -> (i32, i32) {
    %c0_i32 = arith.constant 0 : i32
    %c0_i32_0 = arith.constant 0 : i32
    %c0_i32_1 = arith.constant 0 : i32
    return %c0_i32, %c0_i32_0 : i32, i32
  }
  func.func @transform_6(%arg0: i32) -> (i32, i32) {
    %c0_i32 = arith.constant 0 : i32
    %c0_i32_0 = arith.constant 0 : i32
    %c0_i32_1 = arith.constant 0 : i32
    return %c0_i32, %c0_i32_0 : i32, i32
  }
  func.func @transform_7(%arg0: i32) -> (i32, i32) {
    %c0_i32 = arith.constant 0 : i32
    %c0_i32_0 = arith.constant 0 : i32
    return %arg0, %c0_i32 : i32, i32
  }
}

</mosaic_0001>

<llo_original>
// kernel: tpu_custom_call.1
$region0: #{tpu_custom_call.1}
  #allocation0 [shape = 'u32[]', space=smem, size = 0x4, offset = 0x4, fixed_abs, tag = 'smem constant byte address 0x4 - core index']
  #allocation1 [shape = 'u32[144,128]{1,0:T(1,128)}', space=vmem, size = 0x12000, scoped, tag = 'internal scratch']
  %s0 = inlined_call_operand.hbm [shape: f32[8,16], index: 0, kind: input, shape index: {}]
  %s1 = inlined_call_operand.hbm [shape: f32[16,256], index: 1, kind: input, shape index: {}]
  %s2 = inlined_call_operand.vmem [shape: f32[1,256], index: 2, kind: input, shape index: {}]
  %s3 = inlined_call_operand.hbm [shape: f32[256,256], index: 3, kind: input, shape index: {}]
  %s4 = inlined_call_operand.vmem [shape: f32[1,256], index: 4, kind: input, shape index: {}]
  %s5 = inlined_call_operand.hbm [shape: f32[256,128], index: 5, kind: input, shape index: {}]
  %s6 = inlined_call_operand.vmem [shape: f32[1,128], index: 6, kind: input, shape index: {}]
  %s7 = inlined_call_operand.vmem [shape: f32[8,4], index: 7, kind: output, shape index: {}]
  %s8 = sld [smem:[#allocation0]]
  $region54: #{tpu_custom_call.1} parent=0
    _
  %s10 = ssub.s32 1, %s8
  %s11 = scalar_select 0, %s10, %s8
  $region1: #{tpu_custom_call.1} parent=0
    #allocation2 [shape = 'u8[4096]{0}', space=vmem, size = 0x1000, scoped, tag = 'input window, operand 0, single buffered']
    #allocation3 [shape = 's32[1]{0}', space=sflag, size = 0x4, scoped, tag = 'scoped memory for tpu_custom_call.1']
    #allocation4 [shape = 'u8[16384]{0}', space=vmem, size = 0x4000, scoped, tag = 'input window, operand 1, single buffered']
    #allocation5 [shape = 's32[1]{0}', space=sflag, size = 0x4, scoped, tag = 'scoped memory for tpu_custom_call.1']
    #allocation6 [shape = 'u8[262144]{0}', space=vmem, size = 0x40000, scoped, tag = 'input window, operand 3, single buffered']
    #allocation7 [shape = 'u8[131072]{0}', space=vmem, size = 0x20000, scoped, tag = 'input window, operand 5, single buffered']
    #allocation8 [shape = 's32[1]{0}', space=sflag, size = 0x4, scoped, tag = 'scoped memory for tpu_custom_call.1']
    %12 = vsyncpa [#allocation3], 0
    %13 = vsyncpa [#allocation5], 0
    %14 = vsyncpa [#allocation8], 0
    // Predicated region
    $region2: #{tpu_custom_call.1} parent=1 // pred_check
      _
    $region3: #{tpu_custom_call.1} parent=1 // pred_check_branch
      %16 = sbr.rel (0) target = $region5
    $region4: #{tpu_custom_call.1} parent=1 // pred_region
      %s18 = ssub.s32 128, 128
      %19 = vsyncadd [#allocation3], %s18
      %s21 = sshll.u32 [#allocation2], 4
      %s22 = int_to_ptr.vmem [resolvable:$true] %s21
      %24 = dma.hbm_to_vmem [thread:$0]  %s0, 128, %s22, [#allocation3]
    $region5: #{tpu_custom_call.1} parent=1 // pred_fallthru
      _
    // Predicated region
    $region6: #{tpu_custom_call.1} parent=1 // pred_check
      _
    $region7: #{tpu_custom_call.1} parent=1 // pred_check_branch
      %26 = sbr.rel (0) target = $region9
    $region8: #{tpu_custom_call.1} parent=1 // pred_region
      %s28 = ssub.s32 512, 512
      %29 = vsyncadd [#allocation5], %s28
      %s30 = sshll.u32 [#allocation4], 4
      %s31 = int_to_ptr.vmem [resolvable:$true] %s30
      %36 = dma.hbm_to_vmem [thread:$0]  %s1, 512, %s31, [#allocation5], 256, 256, 16
    $region9: #{tpu_custom_call.1} parent=1 // pred_fallthru
      _
    // Predicated region
    $region10: #{tpu_custom_call.1} parent=1 // pred_check
      _
    $region11: #{tpu_custom_call.1} parent=1 // pred_check_branch
      %38 = sbr.rel (0) target = $region13
    $region12: #{tpu_custom_call.1} parent=1 // pred_region
      _
    $region13: #{tpu_custom_call.1} parent=1 // pred_fallthru
      _
    // Predicated region
    $region14: #{tpu_custom_call.1} parent=1 // pred_check
      _
    $region15: #{tpu_custom_call.1} parent=1 // pred_check_branch
      %40 = sbr.rel (0) target = $region17
    $region16: #{tpu_custom_call.1} parent=1 // pred_region
      %s42 = ssub.s32 8192, 8192
      %43 = vsyncadd [#allocation5], %s42
      %s44 = sshll.u32 [#allocation6], 4
      %s45 = int_to_ptr.vmem [resolvable:$true] %s44
      %50 = dma.hbm_to_vmem [thread:$0]  %s3, 8192, %s45, [#allocation5], 256, 256, 16
    $region17: #{tpu_custom_call.1} parent=1 // pred_fallthru
      _
    // Predicated region
    $region18: #{tpu_custom_call.1} parent=1 // pred_check
      _
    $region19: #{tpu_custom_call.1} parent=1 // pred_check_branch
      %52 = sbr.rel (0) target = $region21
    $region20: #{tpu_custom_call.1} parent=1 // pred_region
      _
    $region21: #{tpu_custom_call.1} parent=1 // pred_fallthru
      _
    // Predicated region
    $region22: #{tpu_custom_call.1} parent=1 // pred_check
      _
    $region23: #{tpu_custom_call.1} parent=1 // pred_check_branch
      %54 = sbr.rel (0) target = $region25
    $region24: #{tpu_custom_call.1} parent=1 // pred_region
      %s56 = ssub.s32 4096, 4096
      %57 = vsyncadd [#allocation8], %s56
      %s58 = sshll.u32 [#allocation7], 4
      %s59 = int_to_ptr.vmem [resolvable:$true] %s58
      %64 = dma.hbm_to_vmem [thread:$0]  %s5, 4096, %s59, [#allocation8], 128, 128, 8
    $region25: #{tpu_custom_call.1} parent=1 // pred_fallthru
      _
    // Predicated region
    $region26: #{tpu_custom_call.1} parent=1 // pred_check
      _
    $region27: #{tpu_custom_call.1} parent=1 // pred_check_branch
      %66 = sbr.rel (0) target = $region29
    $region28: #{tpu_custom_call.1} parent=1 // pred_region
      _
    $region29: #{tpu_custom_call.1} parent=1 // pred_fallthru
      _
    // Predicated region
    $region30: #{tpu_custom_call.1} parent=1 // pred_check
      _
    $region31: #{tpu_custom_call.1} parent=1 // pred_check_branch
      %68 = sbr.rel (0) target = $region33
    $region32: #{tpu_custom_call.1} parent=1 // pred_region
      %69 = dma.done [#allocation3], 128
    $region33: #{tpu_custom_call.1} parent=1 // pred_fallthru
      _
    // Predicated region
    $region34: #{tpu_custom_call.1} parent=1 // pred_check
      _
    $region35: #{tpu_custom_call.1} parent=1 // pred_check_branch
      %71 = sbr.rel (0) target = $region37
    $region36: #{tpu_custom_call.1} parent=1 // pred_region
      %72 = dma.done [#allocation5], 512
    $region37: #{tpu_custom_call.1} parent=1 // pred_fallthru
      _
    // Predicated region
    $region38: #{tpu_custom_call.1} parent=1 // pred_check
      _
    $region39: #{tpu_custom_call.1} parent=1 // pred_check_branch
      %74 = sbr.rel (0) target = $region41
    $region40: #{tpu_custom_call.1} parent=1 // pred_region
      %75 = dma.done [#allocation5], 8192
    $region41: #{tpu_custom_call.1} parent=1 // pred_fallthru
      _
    // Predicated region
    $region42: #{tpu_custom_call.1} parent=1 // pred_check
      _
    $region43: #{tpu_custom_call.1} parent=1 // pred_check_branch
      %77 = sbr.rel (0) target = $region45
    $region44: #{tpu_custom_call.1} parent=1 // pred_region
      %78 = dma.done [#allocation8], 4096
    $region45: #{tpu_custom_call.1} parent=1 // pred_fallthru
      _
    %v79 = vld [vmem:[#allocation2] sm:$0xff]
    %v80 = vld [vmem:[#allocation4] sm:$0xff]
    %v81 = vld [vmem:[#allocation4 + $0x8] sm:$0xff]
    %v82 = vld [vmem:[#allocation4 + $0x10] sm:$0xff]
    %v83 = vld [vmem:[#allocation4 + $0x18] sm:$0xff]
    %v84 = vld [vmem:[%s2] sm:$0x3]
    %v86 = vlaneseq
    %v87 = vshrl.u32 %v86, 7
    %v88 = vsub.s32 0, %v87
    %v89 = vrot.slane %v84, %v88
    %v90 = vlaneseq
    %v91 = vshrl.u32 %v90, 7
    %v92 = vsub.s32 1, %v91
    %v93 = vrot.slane %v84, %v92
    %vm96 = vcmask 130048
    %v98 = vsel %vm96, %v79, 0
    %100 = vmatprep.subr.mxu0 0.0
    %101 = vmatpush1.msra.mxu0 0.0
    %102 = vmatprep.subr.mxu0 0.0
    %103 = vmatpush1.msra.mxu0 0.0
    %104 = vmatprep.subr.mxu0 0.0
    %105 = vmatpush1.msra.mxu0 0.0
    %106 = vmatprep.subr.mxu0 0.0
    %107 = vmatpush1.msra.mxu0 0.0
    %108 = vmatprep.subr.mxu0 0.0
    %109 = vmatpush1.msra.mxu0 0.0
    %110 = vmatprep.subr.mxu0 0.0
    %111 = vmatpush1.msra.mxu0 0.0
    %112 = vmatprep.subr.mxu0 0.0
    %113 = vmatpush1.msra.mxu0 0.0
    %114 = vmatprep.subr.mxu0 0.0
    %115 = vmatpush1.msra.mxu0 0.0
    %116 = vmatprep.subr.mxu0 0.0
    %117 = vmatpush1.msra.mxu0 0.0
    %118 = vmatprep.subr.mxu0 0.0
    %119 = vmatpush1.msra.mxu0 0.0
    %120 = vmatprep.subr.mxu0 0.0
    %121 = vmatpush1.msra.mxu0 0.0
    %122 = vmatprep.subr.mxu0 0.0
    %123 = vmatpush1.msra.mxu0 0.0
    %124 = vmatprep.subr.mxu0 0.0
    %125 = vmatpush1.msra.mxu0 0.0
    %126 = vmatprep.subr.mxu0 0.0
    %127 = vmatpush1.msra.mxu0 0.0
    %128 = vmatprep.subr.mxu0 %v83
    %129 = vmatpush1.msra.mxu0 %v82
    %130 = vmatprep.subr.mxu0 %v81
    %131 = vmatpush1.msra.mxu0 %v80
    %132 = vmatprep.subr.mxu0 0.0
    %133 = vmatpush2.msra.mxu0 0.0
    %134 = vmatprep.subr.mxu0 0.0
    %135 = vmatpush2.msra.mxu0 0.0
    %136 = vmatprep.subr.mxu0 0.0
    %137 = vmatpush2.msra.mxu0 0.0
    %138 = vmatprep.subr.mxu0 0.0
    %139 = vmatpush2.msra.mxu0 0.0
    %140 = vmatprep.subr.mxu0 0.0
    %141 = vmatpush2.msra.mxu0 0.0
    %142 = vmatprep.subr.mxu0 0.0
    %143 = vmatpush2.msra.mxu0 0.0
    %144 = vmatprep.subr.mxu0 0.0
    %145 = vmatpush2.msra.mxu0 0.0
    %146 = vmatprep.subr.mxu0 0.0
    %147 = vmatpush2.msra.mxu0 0.0
    %148 = vmatprep.subr.mxu0 0.0
    %149 = vmatpush2.msra.mxu0 0.0
    %150 = vmatprep.subr.mxu0 0.0
    %151 = vmatpush2.msra.mxu0 0.0
    %152 = vmatprep.subr.mxu0 0.0
    %153 = vmatpush2.msra.mxu0 0.0
    %154 = vmatprep.subr.mxu0 0.0
    %155 = vmatpush2.msra.mxu0 0.0
    %156 = vmatprep.subr.mxu0 0.0
    %157 = vmatpush2.msra.mxu0 0.0
    %158 = vmatprep.subr.mxu0 0.0
    %159 = vmatpush2.msra.mxu0 0.0
    %160 = vmatprep.subr.mxu0 0.0
    %161 = vmatpush2.msra.mxu0 0.0
    %162 = vmatprep.subr.mxu0 0.0
    %163 = vmatpush2.msra.mxu0 0.0
    %164 = vmatprep.mubr.f32.mxu0 0.0
    %165 = vmatmul.mubr.f32.gmra.mxu0 %v98
    %v166 = vpop.f32.mrf.mxu0
    %v167 = vadd.f32 %v89, %v166
    %v168 = vpop.f32.mrf.mxu0
    %v169 = vadd.f32 %v93, %v168
    %170 = vdwg.mxu0
    %v171 = vmax.f32 %v167, 0.0
    %v172 = vmax.f32 %v169, 0.0
    %v173 = vld [vmem:[#allocation6] sm:$0xff]
    %v174 = vld [vmem:[#allocation6 + $0x8] sm:$0xff]
    %v175 = vld [vmem:[#allocation6 + $0x10] sm:$0xff]
    %v176 = vld [vmem:[#allocation6 + $0x18] sm:$0xff]
    %v177 = vld [vmem:[#allocation6 + $0x20] sm:$0xff]
    %v178 = vld [vmem:[#allocation6 + $0x28] sm:$0xff]
    %v179 = vld [vmem:[#allocation6 + $0x30] sm:$0xff]
    %v180 = vld [vmem:[#allocation6 + $0x38] sm:$0xff]
    %v181 = vld [vmem:[#allocation6 + $0x40] sm:$0xff]
    %v182 = vld [vmem:[#allocation6 + $0x48] sm:$0xff]
    %v183 = vld [vmem:[#allocation6 + $0x50] sm:$0xff]
    %v184 = vld [vmem:[#allocation6 + $0x58] sm:$0xff]
    %v185 = vld [vmem:[#allocation6 + $0x60] sm:$0xff]
    %v186 = vld [vmem:[#allocation6 + $0x68] sm:$0xff]
    %v187 = vld [vmem:[#allocation6 + $0x70] sm:$0xff]
    %v188 = vld [vmem:[#allocation6 + $0x78] sm:$0xff]
    %v189 = vld [vmem:[#allocation6 + $0x80] sm:$0xff]
    %v190 = vld [vmem:[#allocation6 + $0x88] sm:$0xff]
    %v191 = vld [vmem:[#allocation6 + $0x90] sm:$0xff]
    %v192 = vld [vmem:[#allocation6 + $0x98] sm:$0xff]
    %v193 = vld [vmem:[#allocation6 + $0xa0] sm:$0xff]
    %v194 = vld [vmem:[#allocation6 + $0xa8] sm:$0xff]
    %v195 = vld [vmem:[#allocation6 + $0xb0] sm:$0xff]
    %v196 = vld [vmem:[#allocation6 + $0xb8] sm:$0xff]
    %v197 = vld [vmem:[#allocation6 + $0xc0] sm:$0xff]
    %v198 = vld [vmem:[#allocation6 + $0xc8] sm:$0xff]
    %v199 = vld [vmem:[#allocation6 + $0xd0] sm:$0xff]
    %v200 = vld [vmem:[#allocation6 + $0xd8] sm:$0xff]
    %v201 = vld [vmem:[#allocation6 + $0xe0] sm:$0xff]
    %v202 = vld [vmem:[#allocation6 + $0xe8] sm:$0xff]
    %v203 = vld [vmem:[#allocation6 + $0xf0] sm:$0xff]
    %v204 = vld [vmem:[#allocation6 + $0xf8] sm:$0xff]
    %v205 = vld [vmem:[#allocation6 + $0x100] sm:$0xff]
    %v206 = vld [vmem:[#allocation6 + $0x108] sm:$0xff]
    %v207 = vld [vmem:[#allocation6 + $0x110] sm:$0xff]
    %v208 = vld [vmem:[#allocation6 + $0x118] sm:$0xff]
    %v209 = vld [vmem:[#allocation6 + $0x120] sm:$0xff]
    %v210 = vld [vmem:[#allocation6 + $0x128] sm:$0xff]
    %v211 = vld [vmem:[#allocation6 + $0x130] sm:$0xff]
    %v212 = vld [vmem:[#allocation6 + $0x138] sm:$0xff]
    %v213 = vld [vmem:[#allocation6 + $0x140] sm:$0xff]
    %v214 = vld [vmem:[#allocation6 + $0x148] sm:$0xff]
    %v215 = vld [vmem:[#allocation6 + $0x150] sm:$0xff]
    %v216 = vld [vmem:[#allocation6 + $0x158] sm:$0xff]
    %v217 = vld [vmem:[#allocation6 + $0x160] sm:$0xff]
    %v218 = vld [vmem:[#allocation6 + $0x168] sm:$0xff]
    %v219 = vld [vmem:[#allocation6 + $0x170] sm:$0xff]
    %v220 = vld [vmem:[#allocation6 + $0x178] sm:$0xff]
    %v221 = vld [vmem:[#allocation6 + $0x180] sm:$0xff]
    %v222 = vld [vmem:[#allocation6 + $0x188] sm:$0xff]
    %v223 = vld [vmem:[#allocation6 + $0x190] sm:$0xff]
    %v224 = vld [vmem:[#allocation6 + $0x198] sm:$0xff]
    %v225 = vld [vmem:[#allocation6 + $0x1a0] sm:$0xff]
    %v226 = vld [vmem:[#allocation6 + $0x1a8] sm:$0xff]
    %v227 = vld [vmem:[#allocation6 + $0x1b0] sm:$0xff]
    %v228 = vld [vmem:[#allocation6 + $0x1b8] sm:$0xff]
    %v229 = vld [vmem:[#allocation6 + $0x1c0] sm:$0xff]
    %v230 = vld [vmem:[#allocation6 + $0x1c8] sm:$0xff]
    %v231 = vld [vmem:[#allocation6 + $0x1d0] sm:$0xff]
    %v232 = vld [vmem:[#allocation6 + $0x1d8] sm:$0xff]
    %v233 = vld [vmem:[#allocation6 + $0x1e0] sm:$0xff]
    %v234 = vld [vmem:[#allocation6 + $0x1e8] sm:$0xff]
    %v235 = vld [vmem:[#allocation6 + $0x1f0] sm:$0xff]
    %v236 = vld [vmem:[#allocation6 + $0x1f8] sm:$0xff]
    %v237 = vld [vmem:[%s4] sm:$0x3]
    %v239 = vlaneseq
    %v240 = vshrl.u32 %v239, 7
    %v241 = vsub.s32 0, %v240
    %v242 = vrot.slane %v237, %v241
    %v243 = vlaneseq
    %v244 = vshrl.u32 %v243, 7
    %v245 = vsub.s32 1, %v244
    %v246 = vrot.slane %v237, %v245
    %249 = vmatprep.subr.mxu0 %v204
    %250 = vmatpush1.msra.mxu0 %v203
    %251 = vmatprep.subr.mxu0 %v202
    %252 = vmatpush1.msra.mxu0 %v201
    %253 = vmatprep.subr.mxu0 %v200
    %254 = vmatpush1.msra.mxu0 %v199
    %255 = vmatprep.subr.mxu0 %v198
    %256 = vmatpush1.msra.mxu0 %v197
    %257 = vmatprep.subr.mxu0 %v196
    %258 = vmatpush1.msra.mxu0 %v195
    %259 = vmatprep.subr.mxu0 %v194
    %260 = vmatpush1.msra.mxu0 %v193
    %261 = vmatprep.subr.mxu0 %v192
    %262 = vmatpush1.msra.mxu0 %v191
    %263 = vmatprep.subr.mxu0 %v190
    %264 = vmatpush1.msra.mxu0 %v189
    %265 = vmatprep.subr.mxu0 %v188
    %266 = vmatpush1.msra.mxu0 %v187
    %267 = vmatprep.subr.mxu0 %v186
    %268 = vmatpush1.msra.mxu0 %v185
    %269 = vmatprep.subr.mxu0 %v184
    %270 = vmatpush1.msra.mxu0 %v183
    %271 = vmatprep.subr.mxu0 %v182
    %272 = vmatpush1.msra.mxu0 %v181
    %273 = vmatprep.subr.mxu0 %v180
    %274 = vmatpush1.msra.mxu0 %v179
    %275 = vmatprep.subr.mxu0 %v178
    %276 = vmatpush1.msra.mxu0 %v177
    %277 = vmatprep.subr.mxu0 %v176
    %278 = vmatpush1.msra.mxu0 %v175
    %279 = vmatprep.subr.mxu0 %v174
    %280 = vmatpush1.msra.mxu0 %v173
    %281 = vmatprep.subr.mxu0 %v236
    %282 = vmatpush2.msra.mxu0 %v235
    %283 = vmatprep.subr.mxu0 %v234
    %284 = vmatpush2.msra.mxu0 %v233
    %285 = vmatprep.subr.mxu0 %v232
    %286 = vmatpush2.msra.mxu0 %v231
    %287 = vmatprep.subr.mxu0 %v230
    %288 = vmatpush2.msra.mxu0 %v229
    %289 = vmatprep.subr.mxu0 %v228
    %290 = vmatpush2.msra.mxu0 %v227
    %291 = vmatprep.subr.mxu0 %v226
    %292 = vmatpush2.msra.mxu0 %v225
    %293 = vmatprep.subr.mxu0 %v224
    %294 = vmatpush2.msra.mxu0 %v223
    %295 = vmatprep.subr.mxu0 %v222
    %296 = vmatpush2.msra.mxu0 %v221
    %297 = vmatprep.subr.mxu0 %v220
    %298 = vmatpush2.msra.mxu0 %v219
    %299 = vmatprep.subr.mxu0 %v218
    %300 = vmatpush2.msra.mxu0 %v217
    %301 = vmatprep.subr.mxu0 %v216
    %302 = vmatpush2.msra.mxu0 %v215
    %303 = vmatprep.subr.mxu0 %v214
    %304 = vmatpush2.msra.mxu0 %v213
    %305 = vmatprep.subr.mxu0 %v212
    %306 = vmatpush2.msra.mxu0 %v211
    %307 = vmatprep.subr.mxu0 %v210
    %308 = vmatpush2.msra.mxu0 %v209
    %309 = vmatprep.subr.mxu0 %v208
    %310 = vmatpush2.msra.mxu0 %v207
    %311 = vmatprep.subr.mxu0 %v206
    %312 = vmatpush2.msra.mxu0 %v205
    %313 = vmatprep.mubr.f32.mxu0 %v172
    %314 = vmatmul.mubr.f32.gmra.mxu0 %v171
    %v315 = vpop.f32.mrf.mxu0
    %v316 = vadd.f32 %v242, %v315
    %v317 = vpop.f32.mrf.mxu0
    %v318 = vadd.f32 %v246, %v317
    %319 = vdwg.mxu0
    %v320 = vmax.f32 %v316, 0.0
    %v321 = vmax.f32 %v318, 0.0
    %v322 = vld [vmem:[#allocation7] sm:$0xff]
    %v323 = vld [vmem:[#allocation7 + $0x8] sm:$0xff]
    %v324 = vld [vmem:[#allocation7 + $0x10] sm:$0xff]
    %v325 = vld [vmem:[#allocation7 + $0x18] sm:$0xff]
    %v326 = vld [vmem:[#allocation7 + $0x20] sm:$0xff]
    %v327 = vld [vmem:[#allocation7 + $0x28] sm:$0xff]
    %v328 = vld [vmem:[#allocation7 + $0x30] sm:$0xff]
    %v329 = vld [vmem:[#allocation7 + $0x38] sm:$0xff]
    %v330 = vld [vmem:[#allocation7 + $0x40] sm:$0xff]
    %v331 = vld [vmem:[#allocation7 + $0x48] sm:$0xff]
    %v332 = vld [vmem:[#allocation7 + $0x50] sm:$0xff]
    %v333 = vld [vmem:[#allocation7 + $0x58] sm:$0xff]
    %v334 = vld [vmem:[#allocation7 + $0x60] sm:$0xff]
    %v335 = vld [vmem:[#allocation7 + $0x68] sm:$0xff]
    %v336 = vld [vmem:[#allocation7 + $0x70] sm:$0xff]
    %v337 = vld [vmem:[#allocation7 + $0x78] sm:$0xff]
    %v338 = vld [vmem:[#allocation7 + $0x80] sm:$0xff]
    %v339 = vld [vmem:[#allocation7 + $0x88] sm:$0xff]
    %v340 = vld [vmem:[#allocation7 + $0x90] sm:$0xff]
    %v341 = vld [vmem:[#allocation7 + $0x98] sm:$0xff]
    %v342 = vld [vmem:[#allocation7 + $0xa0] sm:$0xff]
    %v343 = vld [vmem:[#allocation7 + $0xa8] sm:$0xff]
    %v344 = vld [vmem:[#allocation7 + $0xb0] sm:$0xff]
    %v345 = vld [vmem:[#allocation7 + $0xb8] sm:$0xff]
    %v346 = vld [vmem:[#allocation7 + $0xc0] sm:$0xff]
    %v347 = vld [vmem:[#allocation7 + $0xc8] sm:$0xff]
    %v348 = vld [vmem:[#allocation7 + $0xd0] sm:$0xff]
    %v349 = vld [vmem:[#allocation7 + $0xd8] sm:$0xff]
    %v350 = vld [vmem:[#allocation7 + $0xe0] sm:$0xff]
    %v351 = vld [vmem:[#allocation7 + $0xe8] sm:$0xff]
    %v352 = vld [vmem:[#allocation7 + $0xf0] sm:$0xff]
    %v353 = vld [vmem:[#allocation7 + $0xf8] sm:$0xff]
    %v354 = vld [vmem:[%s6] sm:$0x1]
    %v356 = vlaneseq
    %v357 = vshrl.u32 %v356, 7
    %v358 = vsub.s32 0, %v357
    %v359 = vrot.slane %v354, %v358
    %361 = vmatprep.subr.mxu0 0.0
    %362 = vmatpush1.msra.mxu0 %v337
    %363 = vmatprep.subr.mxu0 0.0
    %364 = vmatpush1.msra.mxu0 %v336
    %365 = vmatprep.subr.mxu0 0.0
    %366 = vmatpush1.msra.mxu0 %v335
    %367 = vmatprep.subr.mxu0 0.0
    %368 = vmatpush1.msra.mxu0 %v334
    %369 = vmatprep.subr.mxu0 0.0
    %370 = vmatpush1.msra.mxu0 %v333
    %371 = vmatprep.subr.mxu0 0.0
    %372 = vmatpush1.msra.mxu0 %v332
    %373 = vmatprep.subr.mxu0 0.0
    %374 = vmatpush1.msra.mxu0 %v331
    %375 = vmatprep.subr.mxu0 0.0
    %376 = vmatpush1.msra.mxu0 %v330
    %377 = vmatprep.subr.mxu0 0.0
    %378 = vmatpush1.msra.mxu0 %v329
    %379 = vmatprep.subr.mxu0 0.0
    %380 = vmatpush1.msra.mxu0 %v328
    %381 = vmatprep.subr.mxu0 0.0
    %382 = vmatpush1.msra.mxu0 %v327
    %383 = vmatprep.subr.mxu0 0.0
    %384 = vmatpush1.msra.mxu0 %v326
    %385 = vmatprep.subr.mxu0 0.0
    %386 = vmatpush1.msra.mxu0 %v325
    %387 = vmatprep.subr.mxu0 0.0
    %388 = vmatpush1.msra.mxu0 %v324
    %389 = vmatprep.subr.mxu0 0.0
    %390 = vmatpush1.msra.mxu0 %v323
    %391 = vmatprep.subr.mxu0 0.0
    %392 = vmatpush1.msra.mxu0 %v322
    %393 = vmatprep.subr.mxu0 0.0
    %394 = vmatpush2.msra.mxu0 %v353
    %395 = vmatprep.subr.mxu0 0.0
    %396 = vmatpush2.msra.mxu0 %v352
    %397 = vmatprep.subr.mxu0 0.0
    %398 = vmatpush2.msra.mxu0 %v351
    %399 = vmatprep.subr.mxu0 0.0
    %400 = vmatpush2.msra.mxu0 %v350
    %401 = vmatprep.subr.mxu0 0.0
    %402 = vmatpush2.msra.mxu0 %v349
    %403 = vmatprep.subr.mxu0 0.0
    %404 = vmatpush2.msra.mxu0 %v348
    %405 = vmatprep.subr.mxu0 0.0
    %406 = vmatpush2.msra.mxu0 %v347
    %407 = vmatprep.subr.mxu0 0.0
    %408 = vmatpush2.msra.mxu0 %v346
    %409 = vmatprep.subr.mxu0 0.0
    %410 = vmatpush2.msra.mxu0 %v345
    %411 = vmatprep.subr.mxu0 0.0
    %412 = vmatpush2.msra.mxu0 %v344
    %413 = vmatprep.subr.mxu0 0.0
    %414 = vmatpush2.msra.mxu0 %v343
    %415 = vmatprep.subr.mxu0 0.0
    %416 = vmatpush2.msra.mxu0 %v342
    %417 = vmatprep.subr.mxu0 0.0
    %418 = vmatpush2.msra.mxu0 %v341
    %419 = vmatprep.subr.mxu0 0.0
    %420 = vmatpush2.msra.mxu0 %v340
    %421 = vmatprep.subr.mxu0 0.0
    %422 = vmatpush2.msra.mxu0 %v339
    %423 = vmatprep.subr.mxu0 0.0
    %424 = vmatpush2.msra.mxu0 %v338
    %425 = vmatprep.mubr.f32.mxu0 %v321
    %426 = vmatmul.mubr.f32.gmra.mxu0 %v320
    %v427 = vpop.f32.mrf.mxu0
    %v428 = vadd.f32 %v359, %v427
    %v429 = vpop.f32.mrf.mxu0
    %430 = vdwg.mxu0
    %v431 = vtanh.pop %v428
    %vm432 = vcmask 31744
    %433 = vst.msk [vmem:[%s7] sm:$0xff] %vm432, %v431
    // Predicated region
    $region46: #{tpu_custom_call.1} parent=1 // pred_check
      _
    $region47: #{tpu_custom_call.1} parent=1 // pred_check_branch
      %435 = sbr.rel (0) target = $region49
    $region48: #{tpu_custom_call.1} parent=1 // pred_region
      _
    $region49: #{tpu_custom_call.1} parent=1 // pred_fallthru
      _
    // Predicated region
    $region50: #{tpu_custom_call.1} parent=1 // pred_check
      _
    $region51: #{tpu_custom_call.1} parent=1 // pred_check_branch
      %437 = sbr.rel (0) target = $region53
    $region52: #{tpu_custom_call.1} parent=1 // pred_region
      _
    $region53: #{tpu_custom_call.1} parent=1 // pred_fallthru
      _
    %438 = vsyncpa [#allocation3], 1
    %439 = vsyncpa [#allocation5], 1
    %440 = vsyncpa [#allocation8], 1

</llo_original>
